<compile_context>
chip_gen: v7x
topology: tpu7x:2x2x1
jax: 0.10.0
libtpu: 0.0.40
codegen_flags: <defaults>
</compile_context>

<pallas_src>
import jax
import jax.numpy as jnp
from jax.experimental import pallas as pl
from jax.experimental.pallas import tpu as pltpu

EPS = 1e-5


def _layernorm_kernel(x_ref, o_ref):
    # x_ref: (tb, C, tile_l) block in VMEM. Normalize over C (axis=-2) at every
    # (row, lane) position, in f32 regardless of input dtype.  Computation is
    # per-lane, so OOB lanes of a partial boundary block are harmless (their
    # results are discarded by the masked writeback).
    x = x_ref[...].astype(jnp.float32)
    mean = jnp.mean(x, axis=-2, keepdims=True)        # (tb, 1, tile_l)
    xc = x - mean
    var = jnp.mean(xc * xc, axis=-2, keepdims=True)   # biased variance
    inv = jax.lax.rsqrt(var + EPS)                    # EUP slot, ~free here
    o_ref[...] = (xc * inv).astype(o_ref.dtype)


def _largest_divisor_leq(n, cap):
    cap = max(1, min(n, cap))
    for d in range(cap, 0, -1):
        if n % d == 0:
            return d
    return 1


def layer_norm_ncl(x, *, target_block_bytes=2 << 20, tile_l=None, tb=None):
    """x: (B, C, L). LayerNorm over C at every (b, l). Returns (B, C, L).

    Operates directly in the native (B, C, L) layout: no transposes, L on the
    lane axis, C reduced on the sublane axis, ideal 1 HBM read + 1 HBM write.
    """
    B, C, L = x.shape
    itemsize = jnp.dtype(x.dtype).itemsize

    # ---- tile sizing: target ~target_block_bytes of f32 payload per block ----
    if tile_l is None:
        if L <= 128:
            # Short sequences: full-extent lane block (sub-128 lanes -> masked
            # stores). TODO(synk): fuse this LayerNorm into the adjacent Conv1d
            # for production short-seq shapes to keep the store path lane-dense.
            tile_l = L
        else:
            lanes = max(128, (target_block_bytes // (C * 4)) // 128 * 128)
            tile_l = L if lanes >= L else int(lanes)
    if tb is None:
        budget_tb = max(1, int(target_block_bytes // (C * tile_l * 4)))
        tb = _largest_divisor_leq(B, budget_tb)

    num_b = B // tb
    num_l = int(pl.cdiv(L, tile_l))

    # v7x has 2 TensorCores: keep >= 2 parallel grid steps when the input allows.
    if num_b * num_l < 2:
        if B >= 2:
            tb = _largest_divisor_leq(B, B // 2)
            num_b = B // tb
        elif tile_l == L and L >= 256:
            tile_l = ((L // 2 + 127) // 128) * 128
            num_l = int(pl.cdiv(L, tile_l))

    # ---- VMEM budget: double-buffered in + out, plus ~4 block-sized f32 temps ----
    block_bytes = tb * C * tile_l * itemsize
    f32_block_bytes = tb * C * tile_l * 4
    vmem_need = 4 * block_bytes + 4 * f32_block_bytes + (4 << 20)
    vmem_limit = int(min(max(32 << 20, vmem_need), 56 << 20))

    cost = pl.CostEstimate(
        flops=int(5 * B * C * L),
        transcendentals=int(B * L),
        bytes_accessed=int(2 * B * C * L * itemsize),
    )

    return pl.pallas_call(
        _layernorm_kernel,
        out_shape=jax.ShapeDtypeStruct((B, C, L), x.dtype),
        grid=(num_b, num_l),
        in_specs=[pl.BlockSpec((tb, C, tile_l), lambda i, j: (i, 0, j))],
        out_specs=pl.BlockSpec((tb, C, tile_l), lambda i, j: (i, 0, j)),
        compiler_params=pltpu.CompilerParams(
            dimension_semantics=("parallel", "parallel"),
            vmem_limit_bytes=vmem_limit),
        cost_estimate=cost,
    )(x)


def layer_norm_ref(x):
    # Pure-JAX reference matching nn.LayerNorm([C], elementwise_affine=False)
    # applied after permute(0,2,1), then permuted back.
    xt = jnp.transpose(x, (0, 2, 1)).astype(jnp.float32)
    mean = jnp.mean(xt, axis=-1, keepdims=True)
    var = jnp.mean((xt - mean) ** 2, axis=-1, keepdims=True)
    out = (xt - mean) / jnp.sqrt(var + EPS)
    return jnp.transpose(out.astype(x.dtype), (0, 2, 1))


if __name__ == "__main__":
    # TODO(synk): only the LayerNorm submodule of NormalNerModel/IDCNN is
    # implemented as a Pallas kernel; Embedding / Conv1d / Linear / LSTM / CRF
    # of NormalNerModel are outside the scope of this kernel.
    key = jax.random.PRNGKey(0)

    # Small shape consistent with the module: (batch, filters=lstm_hidden*2, seq).
    batch, filters, seq = 2, 32, 16
    x = jax.random.normal(key, (batch, filters, seq), dtype=jnp.float32)
    y = jax.block_until_ready(layer_norm_ncl(x))
    y_ref = layer_norm_ref(x)
    assert y.shape == (batch, filters, seq)
    assert jnp.max(jnp.abs(y - y_ref)) < 1e-5, "mismatch vs reference (small)"

    # Ragged-length case: force small lane tiles so the no-pad partial last
    # L-tile path (masked boundary block, no extra HBM passes) is exercised.
    x2 = jax.random.normal(jax.random.PRNGKey(1), (2, 48, 300), dtype=jnp.float32)
    y2 = jax.block_until_ready(layer_norm_ncl(x2, tile_l=128))
    y2_ref = layer_norm_ref(x2)
    assert y2.shape == (2, 48, 300)
    assert jnp.max(jnp.abs(y2 - y2_ref)) < 1e-5, "mismatch vs reference (ragged)"

    print("KERNEL_OK")
</pallas_src>

<mosaic_0001>
module attributes {stable_mosaic.version = 11 : i64} {
  func.func @_layernorm_kernel(%arg0: i32, %arg1: i32, %arg2: memref<1x32x16xf32, #tpu.memory_space<vmem>>, %arg3: memref<1x32x16xf32, #tpu.memory_space<vmem>>) attributes {dimension_semantics = [#tpu.dimension_semantics<parallel>, #tpu.dimension_semantics<parallel>], iteration_bounds = array<i64: 2, 1>, scalar_prefetch = 0 : i64, scratch_operands = 0 : i64, tpu.core_type = #tpu.core_type<tc>, window_params = [{transform_indices = @transform_0, window_bounds = array<i64: 1, 32, 16>}, {transform_indices = @transform_1, window_bounds = array<i64: 1, 32, 16>}]} {
    %c0 = arith.constant 0 : index
    %c0_0 = arith.constant 0 : index
    %c0_1 = arith.constant 0 : index
    %0 = vector.load %arg2[%c0, %c0_0, %c0_1] : memref<1x32x16xf32, #tpu.memory_space<vmem>>, vector<1x32x16xf32>
    %cst = arith.constant dense<0.000000e+00> : vector<1x16xf32>
    %1 = vector.multi_reduction <add>, %0, %cst [1] : vector<1x32x16xf32> to vector<1x16xf32>
    %2 = vector.shape_cast %1 : vector<1x16xf32> to vector<1x1x16xf32>
    %cst_2 = arith.constant 3.200000e+01 : f32
    %3 = vector.broadcast %cst_2 : f32 to vector<1x1x16xf32>
    %4 = arith.divf %2, %3 : vector<1x1x16xf32>
    %5 = vector.broadcast %4 : vector<1x1x16xf32> to vector<1x32x16xf32>
    %6 = arith.subf %0, %5 : vector<1x32x16xf32>
    %7 = arith.mulf %6, %6 : vector<1x32x16xf32>
    %cst_3 = arith.constant dense<0.000000e+00> : vector<1x16xf32>
    %8 = vector.multi_reduction <add>, %7, %cst_3 [1] : vector<1x32x16xf32> to vector<1x16xf32>
    %9 = vector.shape_cast %8 : vector<1x16xf32> to vector<1x1x16xf32>
    %cst_4 = arith.constant 3.200000e+01 : f32
    %10 = vector.broadcast %cst_4 : f32 to vector<1x1x16xf32>
    %11 = arith.divf %9, %10 : vector<1x1x16xf32>
    %cst_5 = arith.constant 9.99999974E-6 : f32
    %12 = vector.broadcast %cst_5 : f32 to vector<1x1x16xf32>
    %13 = arith.addf %11, %12 : vector<1x1x16xf32>
    %14 = math.rsqrt %13 : vector<1x1x16xf32>
    %15 = vector.broadcast %14 : vector<1x1x16xf32> to vector<1x32x16xf32>
    %16 = arith.mulf %6, %15 : vector<1x32x16xf32>
    %c0_6 = arith.constant 0 : index
    %c0_7 = arith.constant 0 : index
    %c0_8 = arith.constant 0 : index
    %17 = vector.load %arg3[%c0_6, %c0_7, %c0_8] : memref<1x32x16xf32, #tpu.memory_space<vmem>>, vector<1x32x16xf32>
    tpu.vector_store %arg3[%c0_6, %c0_7, %c0_8], %16 {strides = array<i32>} : memref<1x32x16xf32, #tpu.memory_space<vmem>>, vector<1x32x16xf32>,
    return
  }
  func.func @transform_0(%arg0: i32, %arg1: i32) -> (i32, i32, i32) {
    %c0_i32 = arith.constant 0 : i32
    %c0_i32_0 = arith.constant 0 : i32
    return %arg0, %c0_i32, %arg1 : i32, i32, i32
  }
  func.func @transform_1(%arg0: i32, %arg1: i32) -> (i32, i32, i32) {
    %c0_i32 = arith.constant 0 : i32
    %c0_i32_0 = arith.constant 0 : i32
    return %arg0, %c0_i32, %arg1 : i32, i32, i32
  }
}

</mosaic_0001>

<llo_original>
// kernel: tpu_custom_call.1
$region0: #{tpu_custom_call.1}
  #allocation0 [shape = 'u32[]', space=smem, size = 0x4, offset = 0x4, fixed_abs, tag = 'smem constant byte address 0x4 - core index']
  #allocation1 [shape = 'u32[144,128]{1,0:T(1,128)}', space=vmem, size = 0x12000, scoped, tag = 'internal scratch']
  %s0 = inlined_call_operand.vmem [shape: f32[2,32,16], index: 0, kind: input, shape index: {}]
  %s1 = inlined_call_operand.vmem [shape: f32[2,32,16], index: 1, kind: output, shape index: {}]
  %s2 = sld [smem:[#allocation0]]
  $region37: #{tpu_custom_call.1} parent=0
    _
  %s4 = ssub.s32 1, %s2
  %s5 = scalar_select 0, %s4, %s2
  loop: start=0, step=1, limit=4
  $region2: #{tpu_custom_call.1} parent=0 // loop_pre_header
    _
  $region3: #{tpu_custom_call.1} parent=0 // loop_header
    %s7 = sphi 0, %s11
    %p8 = scmp.ge.s32.totalorder %s7, 4
    %s14 = sphi 0, %s26
    %s15 = sphi 0, %s22
    %s16 = sphi 0, %s14
    %s17 = sphi 0, %s15
    %s18 = sphi 0, %s16
    %s19 = sphi 0, %s17
    %s31 = sphi 0, %s33
    %s34 = sphi 0, %s31
    %s35 = sphi 0, %s34
    %s51 = sphi 0, %s35
    %s59 = sphi 0, %s61
    %s62 = sphi 0, %s59
    %s63 = sphi 0, %s62
    %s79 = sphi 0, %s63
  $region4: #{tpu_custom_call.1} parent=0 // loop_header_branch
    %10 = sbr.rel (%p8) target = $region8
  $region5: #{tpu_custom_call.1} parent=0 // loop_body
    %s12 = ssub.s32 %s7, 1
    %s13 = ssub.s32 %s7, 2
    %s20 = sadd.s32 1, %s15
    %p21 = scmp.ge.s32.totalorder %s20, 1
    %s22 = scalar_select %p21, 0, %s20
    %s23 = sadd.s32 1, %s14
    %s24 = scalar_select %p21, %s23, %s14
    %p25 = scmp.ge.s32.totalorder %s24, 2
    %s26 = scalar_select %p25, 0, %s24
    %s27 = ssub.s32 %s14, %s26
    %s28 = ssub.s32 %s15, %s22
    %s29 = sor.u32 %s27, %s28
    %p30 = scmp.eq.s32.totalorder %s29, 0
    %s32 = sadd.s32 %s31, 1
    %s33 = scalar_select %p30, %s31, %s32
    %p36 = pneg %p30
    %p37 = scmp.eq.s32.totalorder %s7, 1
    %p38 = por %p36, %p37
    %p39 = scmp.ne.s32.totalorder %s31, %s34
    %p40 = scmp.eq.s32.totalorder %s7, 0
    %p41 = por %p39, %p40
    %p42 = scmp.ne.s32.totalorder %s31, %s34
    %p43 = scmp.eq.s32.totalorder %s12, 1
    %p44 = por %p42, %p43
    %p45 = scmp.ne.s32.totalorder %s34, %s35
    %p46 = scmp.eq.s32.totalorder %s12, 0
    %p47 = por %p45, %p46
    %p48 = scmp.ne.s32.totalorder %s34, %s35
    %p49 = scmp.eq.s32.totalorder %s13, 1
    %p50 = por %p48, %p49
    %p52 = scmp.ne.s32.totalorder %s35, %s51
    %p53 = scmp.eq.s32.totalorder %s13, 0
    %p54 = por %p52, %p53
    %s55 = ssub.s32 %s14, %s26
    %s56 = ssub.s32 %s15, %s22
    %s57 = sor.u32 %s55, %s56
    %p58 = scmp.eq.s32.totalorder %s57, 0
    %s60 = sadd.s32 %s59, 1
    %s61 = scalar_select %p58, %s59, %s60
    %p64 = pneg %p58
    %p65 = scmp.eq.s32.totalorder %s7, 1
    %p66 = por %p64, %p65
    %p67 = scmp.ne.s32.totalorder %s59, %s62
    %p68 = scmp.eq.s32.totalorder %s7, 0
    %p69 = por %p67, %p68
    %p70 = scmp.ne.s32.totalorder %s59, %s62
    %p71 = scmp.eq.s32.totalorder %s12, 1
    %p72 = por %p70, %p71
    %p73 = scmp.ne.s32.totalorder %s62, %s63
    %p74 = scmp.eq.s32.totalorder %s12, 0
    %p75 = por %p73, %p74
    %p76 = scmp.ne.s32.totalorder %s62, %s63
    %p77 = scmp.eq.s32.totalorder %s13, 1
    %p78 = por %p76, %p77
    %p80 = scmp.ne.s32.totalorder %s63, %s79
    %p81 = scmp.eq.s32.totalorder %s13, 0
    %p82 = por %p80, %p81
    %p83 = scmp.le.s32.totalorder 1, %s7
    %p84 = scmp.lt.s32.totalorder %s7, 3
    %p85 = pnand %p83, %p84
    %p86 = pneg %p85
    // Predicated region
    $region9: #{tpu_custom_call.1} parent=5 // pred_check
      _
    $region10: #{tpu_custom_call.1} parent=5 // pred_check_branch
      %88 = sbr.rel (%p85) target = $region12
    $region11: #{tpu_custom_call.1} parent=5 // pred_region
      %s89 = ssub.s32 %s7, 1
    $region12: #{tpu_custom_call.1} parent=5 // pred_fallthru
      _
    %p90 = scmp.lt.s32.totalorder %s7, 2
    // Predicated region
    $region13: #{tpu_custom_call.1} parent=5 // pred_check
      %p91 = pneg %p90
    $region14: #{tpu_custom_call.1} parent=5 // pred_check_branch
      %93 = sbr.rel (%p91) target = $region16
    $region15: #{tpu_custom_call.1} parent=5 // pred_region
      // Predicated region
      $region17: #{tpu_custom_call.1} parent=15 // pred_check
        %p94 = pneg %p41
      $region18: #{tpu_custom_call.1} parent=15 // pred_check_branch
        %96 = sbr.rel (%p94) target = $region20
      $region19: #{tpu_custom_call.1} parent=15 // pred_region
        %p97 = scmp.lt.s32.totalorder %s14, 1
        %s98 = scalar_select %p97, %s14, 1
        %p99 = scmp.lt.s32.totalorder %s15, 0
        %s100 = scalar_select %p99, %s15, 0
        %s101 = smul.addr %s98, 4
        %s102 = sadd.s32 %s100, %s101
        %s103 = smul.addr %s102, 8
        %s104 = scalar_lea.vmem %s0, %s103
      $region20: #{tpu_custom_call.1} parent=15 // pred_fallthru
        _
    $region16: #{tpu_custom_call.1} parent=5 // pred_fallthru
      _
    %p105 = scmp.le.s32.totalorder 1, %s7
    %p106 = scmp.lt.s32.totalorder %s7, 3
    %p107 = pnand %p105, %p106
    %p108 = pneg %p107
    // Predicated region
    $region21: #{tpu_custom_call.1} parent=5 // pred_check
      _
    $region22: #{tpu_custom_call.1} parent=5 // pred_check_branch
      %110 = sbr.rel (%p107) target = $region24
    $region23: #{tpu_custom_call.1} parent=5 // pred_region
      %s111 = ssub.s32 %s7, 1
      %p112 = scmp.lt.s32.totalorder %s16, 1
      %s113 = scalar_select %p112, %s16, 1
      %p114 = scmp.lt.s32.totalorder %s17, 0
      %s115 = scalar_select %p114, %s17, 0
      %s116 = smul.addr %s113, 4
      %s117 = sadd.s32 %s115, %s116
      %s118 = smul.addr %s117, 8
      %s119 = scalar_lea.vmem %s0, %s118
      %p120 = pneg %p47
      %p121 = pneg %p44
      %p122 = pneg %p75
      %p123 = pneg %p72
      %p124 = scmp.lt.s32.totalorder %s16, 1
      %s125 = scalar_select %p124, %s16, 1
      %p126 = scmp.lt.s32.totalorder %s17, 0
      %s127 = scalar_select %p126, %s17, 0
      %s128 = smul.addr %s125, 4
      %s129 = sadd.s32 %s127, %s128
      %s130 = smul.addr %s129, 8
      %s131 = scalar_lea.vmem %s1, %s130
      %p132 = scmp.lt.s32.totalorder %s16, 1
      %s133 = scalar_select %p132, %s16, 1
      %p134 = scmp.lt.s32.totalorder %s17, 0
      %s135 = scalar_select %p134, %s17, 0
      %s136 = smul.addr %s133, 4
      %s137 = sadd.s32 %s135, %s136
      %s138 = smul.addr %s137, 8
      %s139 = scalar_lea.vmem %s0, %s138
      %p140 = scmp.lt.s32.totalorder %s16, 1
      %s141 = scalar_select %p140, %s16, 1
      %p142 = scmp.lt.s32.totalorder %s17, 0
      %s143 = scalar_select %p142, %s17, 0
      %s144 = smul.addr %s141, 4
      %s145 = sadd.s32 %s143, %s144
      %s146 = smul.addr %s145, 8
      %s147 = scalar_lea.vmem %s1, %s146
      %v148 = vld [vmem:[%s139] sm:$0xff]
      %v149 = vld [vmem:[%s139 + $0x8] sm:$0xff]
      %v150 = vld [vmem:[%s139 + $0x10] sm:$0xff]
      %v151 = vld [vmem:[%s139 + $0x18] sm:$0xff]
      %vm152 = vcmask 130048
      %v153 = vsel %vm152, %v148, 0.0
      %v154 = vsel %vm152, %v149, 0.0
      %v155 = vadd.f32 %v153, %v154
      %v156 = vsel %vm152, %v150, 0.0
      %v157 = vadd.f32 %v155, %v156
      %v158 = vsel %vm152, %v151, 0.0
      %v159 = vadd.f32 %v157, %v158
      %v160 = vrot.slane %v159, 4
      %v161 = vadd.f32 %v159, %v160
      %v162 = vrot.slane %v161, 2
      %v163 = vadd.f32 %v161, %v162
      %v164 = vrot.slane %v163, 1
      %v165 = vadd.f32 %v163, %v164
      %v166 = vrcp.pop 32.0
      %v167 = vmul.f32 %v165, %v166
      %v168 = vsub.f32 %v148, %v167
      %v169 = vsub.f32 %v149, %v167
      %v170 = vsub.f32 %v150, %v167
      %v171 = vsub.f32 %v151, %v167
      %v172 = vmul.f32 %v168, %v168
      %v173 = vmul.f32 %v169, %v169
      %v174 = vmul.f32 %v170, %v170
      %v175 = vmul.f32 %v171, %v171
      %v176 = vsel %vm152, %v172, 0.0
      %v177 = vsel %vm152, %v173, 0.0
      %v178 = vadd.f32 %v176, %v177
      %v179 = vsel %vm152, %v174, 0.0
      %v180 = vadd.f32 %v178, %v179
      %v181 = vsel %vm152, %v175, 0.0
      %v182 = vadd.f32 %v180, %v181
      %v183 = vrot.slane %v182, 4
      %v184 = vadd.f32 %v182, %v183
      %v185 = vrot.slane %v184, 2
      %v186 = vadd.f32 %v184, %v185
      %v187 = vrot.slane %v186, 1
      %v188 = vadd.f32 %v186, %v187
      %v189 = vmul.f32 %v188, %v166
      %v190 = vadd.f32 %v189, 1e-05
      %v191 = vrsqrt.pop %v190
      %v192 = vmul.f32 %v168, %v191
      %v193 = vmul.f32 %v169, %v191
      %v194 = vmul.f32 %v170, %v191
      %v195 = vmul.f32 %v171, %v191
      %196 = vst.msk [vmem:[%s147] sm:$0xff] %vm152, %v192
      %197 = vst.msk [vmem:[%s147 + $0x8] sm:$0xff] %vm152, %v193
      %198 = vst.msk [vmem:[%s147 + $0x10] sm:$0xff] %vm152, %v194
      %199 = vst.msk [vmem:[%s147 + $0x18] sm:$0xff] %vm152, %v195
      %p200 = scmp.lt.s32.totalorder %s16, 1
      %s201 = scalar_select %p200, %s16, 1
      %p202 = scmp.lt.s32.totalorder %s17, 0
      %s203 = scalar_select %p202, %s17, 0
      %s204 = smul.addr %s201, 4
      %s205 = sadd.s32 %s203, %s204
      %s206 = smul.addr %s205, 8
      %s207 = scalar_lea.vmem %s1, %s206
      // Predicated region
      $region25: #{tpu_custom_call.1} parent=23 // pred_check
        %p208 = pneg %p72
      $region26: #{tpu_custom_call.1} parent=23 // pred_check_branch
        %210 = sbr.rel (%p208) target = $region28
      $region27: #{tpu_custom_call.1} parent=23 // pred_region
        _
      $region28: #{tpu_custom_call.1} parent=23 // pred_fallthru
        _
    $region24: #{tpu_custom_call.1} parent=5 // pred_fallthru
      _
    %p211 = scmp.le.s32.totalorder 2, %s7
    // Predicated region
    $region29: #{tpu_custom_call.1} parent=5 // pred_check
      %p212 = pneg %p211
    $region30: #{tpu_custom_call.1} parent=5 // pred_check_branch
      %214 = sbr.rel (%p212) target = $region32
    $region31: #{tpu_custom_call.1} parent=5 // pred_region
      %s215 = ssub.s32 %s7, 2
      // Predicated region
      $region33: #{tpu_custom_call.1} parent=31 // pred_check
        %p216 = pneg %p78
      $region34: #{tpu_custom_call.1} parent=31 // pred_check_branch
        %218 = sbr.rel (%p216) target = $region36
      $region35: #{tpu_custom_call.1} parent=31 // pred_region
        %p219 = scmp.lt.s32.totalorder %s18, 1
        %s220 = scalar_select %p219, %s18, 1
        %p221 = scmp.lt.s32.totalorder %s19, 0
        %s222 = scalar_select %p221, %s19, 0
        %s223 = smul.addr %s220, 4
        %s224 = sadd.s32 %s222, %s223
        %s225 = smul.addr %s224, 8
        %s226 = scalar_lea.vmem %s1, %s225
      $region36: #{tpu_custom_call.1} parent=31 // pred_fallthru
        _
    $region32: #{tpu_custom_call.1} parent=5 // pred_fallthru
      _
  $region6: #{tpu_custom_call.1} parent=0 // loop_footer
    %s11 = sadd.s32 1, %s7
  $region7: #{tpu_custom_call.1} parent=0 // loop_footer_branch
    %6 = sbr.rel target = $region3
  $region8: #{tpu_custom_call.1} parent=0 // loop_exit
    _

</llo_original>
